<compile_context>
chip_gen: v5e
topology: v5e:2x2
jax: 0.10.0
libtpu: 0.0.40
codegen_flags: <defaults>
</compile_context>

<pallas_src>
import jax
import jax.numpy as jnp
from jax.experimental import pallas as pl
from jax.experimental.pallas import tpu as pltpu

FEAT = 512          # fc1 input features in the original module
H_RAW = 500         # original hidden width
HID = 512           # padded hidden width (lane/MXU aligned)
NUM_OUT = 10        # output_neuron_num in the example
OUT_PAD = 128       # lane-dense padded output width
BN_EPS = 1e-5


def _round_up(n, m):
    return ((n + m - 1) // m) * m


def _pick_tb(batch):
    """Batch tile: multiple of 8, <=512 rows, >=2 grid steps when B > 128."""
    batch = max(batch, 1)
    n_steps = pl.cdiv(batch, 512)
    if batch > 128:
        n_steps = max(n_steps, 2)          # let v7x shard the batch over both TCs
    return _round_up(pl.cdiv(batch, n_steps), 8)


# --------------------------------------------------------------------------
# Pallas kernel: x[TB,K](bf16) -> logits[TB,128](f32); BN folded into weights.
# --------------------------------------------------------------------------
def cnnnet_fc_kernel(x_ref, w1_ref, b1_ref, w2_ref, b2_ref, w3_ref, b3_ref,
                     o_ref):
    # fc1 (backbone-proj + BN1 scale folded into w1): x @ w1 + bn1_shift, ReLU
    h = jnp.dot(x_ref[...], w1_ref[...], preferred_element_type=jnp.float32)
    h = jnp.maximum(h + b1_ref[...], 0.0)
    # fc2 (BN2 scale folded): h @ w2 + bn2_shift, ReLU
    h = jnp.dot(h.astype(jnp.bfloat16), w2_ref[...],
                preferred_element_type=jnp.float32)
    h = jnp.maximum(h + b2_ref[...], 0.0)
    # fc3: h @ w3 + b3 (zero-padded to 128 output lanes)
    o = jnp.dot(h.astype(jnp.bfloat16), w3_ref[...],
                preferred_element_type=jnp.float32)
    o_ref[...] = o + b3_ref[...]


def cnnnet_fc_head(x_feat, prepared):
    """x_feat: [B, K] (any K; here K = folded channel dim) -> [B, NUM_OUT] f32."""
    w1, b1, w2, b2, w3, b3 = prepared
    B, K = x_feat.shape
    assert w1.shape[0] == K, (w1.shape, K)

    TB = _pick_tb(B)
    Bp = _round_up(B, TB)
    if Bp != B:
        # Tiny [B,K] array; this pad is negligible (padded rows sliced off below).
        x_feat = jnp.pad(x_feat, ((0, Bp - B), (0, 0)))
    x_feat = x_feat.astype(jnp.bfloat16)    # no-op if producer already emits bf16

    weight_bytes = 2 * (w1.size + w2.size + w3.size) + 4 * (b1.size + b2.size + b3.size)
    cost = pl.CostEstimate(
        flops=2 * Bp * (K * HID + HID * HID + HID * OUT_PAD),
        transcendentals=0,
        bytes_accessed=Bp * K * 2 + weight_bytes + Bp * OUT_PAD * 4,
    )

    out = pl.pallas_call(
        cnnnet_fc_kernel,
        out_shape=jax.ShapeDtypeStruct((Bp, OUT_PAD), jnp.float32),
        grid=(Bp // TB,),
        in_specs=[
            pl.BlockSpec((TB, K), lambda i: (i, 0)),          # activations: tiled
            pl.BlockSpec((K, HID), lambda i: (0, 0)),         # weights: resident
            pl.BlockSpec((1, HID), lambda i: (0, 0)),
            pl.BlockSpec((HID, HID), lambda i: (0, 0)),
            pl.BlockSpec((1, HID), lambda i: (0, 0)),
            pl.BlockSpec((HID, OUT_PAD), lambda i: (0, 0)),
            pl.BlockSpec((1, OUT_PAD), lambda i: (0, 0)),
        ],
        out_specs=pl.BlockSpec((TB, OUT_PAD), lambda i: (i, 0)),
        cost_estimate=cost,
        compiler_params=pltpu.CompilerParams(
            dimension_semantics=("parallel",)),
    )(x_feat, w1, b1, w2, b2, w3, b3)

    return out[:B, :NUM_OUT]


# --------------------------------------------------------------------------
# Host-side parameter construction / folding / padding
# --------------------------------------------------------------------------
def make_raw_params(key):
    """Raw f32 parameters matching the PyTorch module (weights stored [in, out])."""
    ks = jax.random.split(key, 12)
    w1 = jax.random.normal(ks[0], (FEAT, H_RAW), jnp.float32) * 0.02
    w2 = jax.random.normal(ks[1], (H_RAW, H_RAW), jnp.float32) * 0.02
    w3 = jax.random.normal(ks[2], (H_RAW, NUM_OUT), jnp.float32) * 0.02
    b3 = jax.random.normal(ks[3], (NUM_OUT,), jnp.float32) * 0.02
    # BatchNorm1d params / running stats (eval-mode semantics).
    g1 = 1.0 + 0.1 * jax.random.normal(ks[4], (H_RAW,), jnp.float32)
    be1 = 0.1 * jax.random.normal(ks[5], (H_RAW,), jnp.float32)
    m1 = 0.1 * jax.random.normal(ks[6], (H_RAW,), jnp.float32)
    v1 = 1.0 + 0.1 * jax.nn.softplus(jax.random.normal(ks[7], (H_RAW,), jnp.float32))
    g2 = 1.0 + 0.1 * jax.random.normal(ks[8], (H_RAW,), jnp.float32)
    be2 = 0.1 * jax.random.normal(ks[9], (H_RAW,), jnp.float32)
    m2 = 0.1 * jax.random.normal(ks[10], (H_RAW,), jnp.float32)
    v2 = 1.0 + 0.1 * jax.nn.softplus(jax.random.normal(ks[11], (H_RAW,), jnp.float32))
    return dict(w1=w1, w2=w2, w3=w3, b3=b3,
                g1=g1, be1=be1, m1=m1, v1=v1,
                g2=g2, be2=be2, m2=m2, v2=v2)


def _bn_fold(gamma, beta, mean, var):
    scale = gamma / jnp.sqrt(var + BN_EPS)
    shift = beta - mean * scale
    return scale, shift


def prepare_params(raw, w_proj=None):
    """Fold BN (eval-mode) into weights, optionally fold a trailing-linear backbone
    projection into fc1, zero-pad 500->512 / 10->128, cast weights to bf16."""
    s1, t1 = _bn_fold(raw["g1"], raw["be1"], raw["m1"], raw["v1"])
    s2, t2 = _bn_fold(raw["g2"], raw["be2"], raw["m2"], raw["v2"])

    w1f = raw["w1"] * s1[None, :]                       # [512, 500]
    w2f = raw["w2"] * s2[None, :]                       # [500, 500]

    if w_proj is not None:
        # Backbone ends in a pure linear layer -> fold it into fc1 so the kernel's
        # first contraction is over the small channel dim instead of 512.
        w1f = w_proj @ w1f                              # [C, 500]
    k_in = w1f.shape[0]

    w1p = jnp.zeros((k_in, HID), jnp.float32).at[:, :H_RAW].set(w1f)
    b1p = jnp.zeros((1, HID), jnp.float32).at[0, :H_RAW].set(t1)
    w2p = jnp.zeros((HID, HID), jnp.float32).at[:H_RAW, :H_RAW].set(w2f)
    b2p = jnp.zeros((1, HID), jnp.float32).at[0, :H_RAW].set(t2)
    w3p = jnp.zeros((HID, OUT_PAD), jnp.float32).at[:H_RAW, :NUM_OUT].set(raw["w3"])
    b3p = jnp.zeros((1, OUT_PAD), jnp.float32).at[0, :NUM_OUT].set(raw["b3"])

    return (w1p.astype(jnp.bfloat16), b1p,
            w2p.astype(jnp.bfloat16), b2p,
            w3p.astype(jnp.bfloat16), b3p)


# --------------------------------------------------------------------------
# Backbone stand-in (plain JAX glue) and full forward
# --------------------------------------------------------------------------
# TODO(synk): `my_pretrained_classifier` is an external, unspecified module; a
# global-average-pool + linear projection to 512 is used as a deterministic
# stand-in.  If the real backbone does NOT end in a pure linear layer, build
# `prepared = prepare_params(raw)` (no w_proj fold) and feed its 512-wide
# features to cnnnet_fc_head instead.

@jax.jit
def cnnnet_forward(x_nchw, prepared):
    # Global average pool; the backbone's linear projection is folded into fc1,
    # so the kernel consumes the pooled channels directly (emitted as bf16 here
    # to avoid a separate cast pass over a large feature tensor).
    pooled = jnp.mean(x_nchw, axis=(2, 3)).astype(jnp.bfloat16)   # [B, C]
    return cnnnet_fc_head(pooled, prepared)


def reference_forward(x_nchw, w_proj, raw):
    """Pure-JAX f32 reference with original (unfolded, unpadded) params."""
    s1, t1 = _bn_fold(raw["g1"], raw["be1"], raw["m1"], raw["v1"])
    s2, t2 = _bn_fold(raw["g2"], raw["be2"], raw["m2"], raw["v2"])
    pooled = jnp.mean(x_nchw, axis=(2, 3))
    h = pooled @ w_proj                                  # backbone projection
    h = jnp.maximum((h @ raw["w1"]) * s1 + t1, 0.0)
    h = jnp.maximum((h @ raw["w2"]) * s2 + t2, 0.0)
    return h @ raw["w3"] + raw["b3"]


if __name__ == "__main__":
    key = jax.random.PRNGKey(0)
    k_x, k_proj, k_p = jax.random.split(key, 3)

    B, C, H, W = 2, 4, 16, 16
    x = jax.random.normal(k_x, (B, C, H, W), jnp.float32)           # NCHW input
    w_proj = jax.random.normal(k_proj, (C, FEAT), jnp.float32) * 0.1
    raw = make_raw_params(k_p)
    prepared = prepare_params(raw, w_proj)                          # fold backbone + BN

    out = jax.block_until_ready(cnnnet_forward(x, prepared))
    ref = jax.block_until_ready(reference_forward(x, w_proj, raw))

    assert out.shape == (B, NUM_OUT), out.shape
    # bf16 weights/activation feeds introduce ~1e-3 relative error vs f32 reference.
    assert jnp.allclose(out, ref, atol=5e-3, rtol=1e-2), (
        "mismatch vs reference: max abs diff = %g" % float(jnp.max(jnp.abs(out - ref))))
    print("KERNEL_OK")
</pallas_src>

<mosaic_0001>
module attributes {stable_mosaic.version = 11 : i64} {
  func.func @cnnnet_fc_kernel(%arg0: i32, %arg1: memref<8x4xbf16, #tpu.memory_space<vmem>>, %arg2: memref<4x512xbf16, #tpu.memory_space<vmem>>, %arg3: memref<1x512xf32, #tpu.memory_space<vmem>>, %arg4: memref<512x512xbf16, #tpu.memory_space<vmem>>, %arg5: memref<1x512xf32, #tpu.memory_space<vmem>>, %arg6: memref<512x128xbf16, #tpu.memory_space<vmem>>, %arg7: memref<1x128xf32, #tpu.memory_space<vmem>>, %arg8: memref<8x128xf32, #tpu.memory_space<vmem>>) attributes {dimension_semantics = [#tpu.dimension_semantics<parallel>], iteration_bounds = array<i64: 1>, scalar_prefetch = 0 : i64, scratch_operands = 0 : i64, tpu.core_type = #tpu.core_type<tc>, window_params = [{transform_indices = @transform_0, window_bounds = array<i64: 8, 4>}, {pipeline_mode = #tpu.pipeline_mode<synchronous>, transform_indices = @transform_1, window_bounds = array<i64: 4, 512>}, {pipeline_mode = #tpu.pipeline_mode<synchronous>, transform_indices = @transform_2, window_bounds = array<i64: 1, 512>}, {pipeline_mode = #tpu.pipeline_mode<synchronous>, transform_indices = @transform_3, window_bounds = array<i64: 512, 512>}, {pipeline_mode = #tpu.pipeline_mode<synchronous>, transform_indices = @transform_4, window_bounds = array<i64: 1, 512>}, {pipeline_mode = #tpu.pipeline_mode<synchronous>, transform_indices = @transform_5, window_bounds = array<i64: 512, 128>}, {pipeline_mode = #tpu.pipeline_mode<synchronous>, transform_indices = @transform_6, window_bounds = array<i64: 1, 128>}, {transform_indices = @transform_7, window_bounds = array<i64: 8, 128>}]} {
    %c0 = arith.constant 0 : index
    %c0_0 = arith.constant 0 : index
    %0 = vector.load %arg1[%c0, %c0_0] : memref<8x4xbf16, #tpu.memory_space<vmem>>, vector<8x4xbf16>
    %c0_1 = arith.constant 0 : index
    %c0_2 = arith.constant 0 : index
    %1 = vector.load %arg2[%c0_1, %c0_2] : memref<4x512xbf16, #tpu.memory_space<vmem>>, vector<4x512xbf16>
    %cst = arith.constant dense<0.000000e+00> : vector<8x512xf32>
    %2 = tpu.matmul %0, %1, %cst {dimension_numbers = #tpu.dot_dimension_numbers<[1], [0], [0], [1], [0, 0, 1, 1], [], []>} : vector<8x4xbf16>, vector<4x512xbf16>, vector<8x512xf32> -> vector<8x512xf32>
    %c0_3 = arith.constant 0 : index
    %c0_4 = arith.constant 0 : index
    %3 = vector.load %arg3[%c0_3, %c0_4] : memref<1x512xf32, #tpu.memory_space<vmem>>, vector<1x512xf32>
    %4 = vector.broadcast %3 : vector<1x512xf32> to vector<8x512xf32>
    %5 = arith.addf %2, %4 : vector<8x512xf32>
    %cst_5 = arith.constant 0.000000e+00 : f32
    %6 = vector.broadcast %cst_5 : f32 to vector<8x512xf32>
    %7 = arith.maximumf %5, %6 : vector<8x512xf32>
    %8 = arith.truncf %7 : vector<8x512xf32> to vector<8x512xbf16>
    %c0_6 = arith.constant 0 : index
    %c0_7 = arith.constant 0 : index
    %9 = vector.load %arg4[%c0_6, %c0_7] : memref<512x512xbf16, #tpu.memory_space<vmem>>, vector<512x512xbf16>
    %cst_8 = arith.constant dense<0.000000e+00> : vector<8x512xf32>
    %10 = tpu.matmul %8, %9, %cst_8 {dimension_numbers = #tpu.dot_dimension_numbers<[1], [0], [0], [1], [0, 0, 1, 1], [], []>} : vector<8x512xbf16>, vector<512x512xbf16>, vector<8x512xf32> -> vector<8x512xf32>
    %c0_9 = arith.constant 0 : index
    %c0_10 = arith.constant 0 : index
    %11 = vector.load %arg5[%c0_9, %c0_10] : memref<1x512xf32, #tpu.memory_space<vmem>>, vector<1x512xf32>
    %12 = vector.broadcast %11 : vector<1x512xf32> to vector<8x512xf32>
    %13 = arith.addf %10, %12 : vector<8x512xf32>
    %cst_11 = arith.constant 0.000000e+00 : f32
    %14 = vector.broadcast %cst_11 : f32 to vector<8x512xf32>
    %15 = arith.maximumf %13, %14 : vector<8x512xf32>
    %16 = arith.truncf %15 : vector<8x512xf32> to vector<8x512xbf16>
    %c0_12 = arith.constant 0 : index
    %c0_13 = arith.constant 0 : index
    %17 = vector.load %arg6[%c0_12, %c0_13] : memref<512x128xbf16, #tpu.memory_space<vmem>>, vector<512x128xbf16>
    %cst_14 = arith.constant dense<0.000000e+00> : vector<8x128xf32>
    %18 = tpu.matmul %16, %17, %cst_14 {dimension_numbers = #tpu.dot_dimension_numbers<[1], [0], [0], [1], [0, 0, 1, 1], [], []>} : vector<8x512xbf16>, vector<512x128xbf16>, vector<8x128xf32> -> vector<8x128xf32>
    %c0_15 = arith.constant 0 : index
    %c0_16 = arith.constant 0 : index
    %19 = vector.load %arg7[%c0_15, %c0_16] : memref<1x128xf32, #tpu.memory_space<vmem>>, vector<1x128xf32>
    %20 = vector.broadcast %19 : vector<1x128xf32> to vector<8x128xf32>
    %21 = arith.addf %18, %20 : vector<8x128xf32>
    %c0_17 = arith.constant 0 : index
    %c0_18 = arith.constant 0 : index
    %22 = vector.load %arg8[%c0_17, %c0_18] : memref<8x128xf32, #tpu.memory_space<vmem>>, vector<8x128xf32>
    tpu.vector_store %arg8[%c0_17, %c0_18], %21 {strides = array<i32>} : memref<8x128xf32, #tpu.memory_space<vmem>>, vector<8x128xf32>,
    return
  }
  func.func @transform_0(%arg0: i32) -> (i32, i32) {
    %c0_i32 = arith.constant 0 : i32
    %c0_i32_0 = arith.constant 0 : i32
    return %arg0, %c0_i32 : i32, i32
  }
  func.func @transform_1(%arg0: i32) -> (i32, i32) {
    %c0_i32 = arith.constant 0 : i32
    %c0_i32_0 = arith.constant 0 : i32
    %c0_i32_1 = arith.constant 0 : i32
    return %c0_i32, %c0_i32_0 : i32, i32
  }
  func.func @transform_2(%arg0: i32) -> (i32, i32) {
    %c0_i32 = arith.constant 0 : i32
    %c0_i32_0 = arith.constant 0 : i32
    %c0_i32_1 = arith.constant 0 : i32
    return %c0_i32, %c0_i32_0 : i32, i32
  }
  func.func @transform_3(%arg0: i32) -> (i32, i32) {
    %c0_i32 = arith.constant 0 : i32
    %c0_i32_0 = arith.constant 0 : i32
    %c0_i32_1 = arith.constant 0 : i32
    return %c0_i32, %c0_i32_0 : i32, i32
  }
  func.func @transform_4(%arg0: i32) -> (i32, i32) {
    %c0_i32 = arith.constant 0 : i32
    %c0_i32_0 = arith.constant 0 : i32
    %c0_i32_1 = arith.constant 0 : i32
    return %c0_i32, %c0_i32_0 : i32, i32
  }
  func.func @transform_5(%arg0: i32) -> (i32, i32) {
    %c0_i32 = arith.constant 0 : i32
    %c0_i32_0 = arith.constant 0 : i32
    %c0_i32_1 = arith.constant 0 : i32
    return %c0_i32, %c0_i32_0 : i32, i32
  }
  func.func @transform_6(%arg0: i32) -> (i32, i32) {
    %c0_i32 = arith.constant 0 : i32
    %c0_i32_0 = arith.constant 0 : i32
    %c0_i32_1 = arith.constant 0 : i32
    return %c0_i32, %c0_i32_0 : i32, i32
  }
  func.func @transform_7(%arg0: i32) -> (i32, i32) {
    %c0_i32 = arith.constant 0 : i32
    %c0_i32_0 = arith.constant 0 : i32
    return %arg0, %c0_i32 : i32, i32
  }
}

</mosaic_0001>

<llo_original>
// kernel: cnnnet_forward.1
$region0: #{cnnnet_forward.1}
  #allocation0 [shape = 'u32[]', space=smem, size = 0x4, offset = 0x4, fixed_abs, tag = 'smem constant byte address 0x4 - core index']
  #allocation1 [shape = 'u32[72,128]{1,0:T(1,128)}', space=vmem, size = 0x9000, scoped, tag = 'internal scratch']
  %s0 = inlined_call_operand.vmem [shape: bf16[8,4], index: 0, kind: input, shape index: {}]
  %s1 = inlined_call_operand.vmem [shape: bf16[4,512], index: 1, kind: input, shape index: {}]
  %s2 = inlined_call_operand.vmem [shape: f32[1,512], index: 2, kind: input, shape index: {}]
  %s3 = inlined_call_operand.hbm [shape: bf16[512,512], index: 3, kind: input, shape index: {}]
  %s4 = inlined_call_operand.vmem [shape: f32[1,512], index: 4, kind: input, shape index: {}]
  %s5 = inlined_call_operand.hbm [shape: bf16[512,128], index: 5, kind: input, shape index: {}]
  %s6 = inlined_call_operand.vmem [shape: f32[1,128], index: 6, kind: input, shape index: {}]
  %s7 = inlined_call_operand.vmem [shape: f32[8,128], index: 7, kind: output, shape index: {}]
  %s8 = sld [smem:[#allocation0]]
  $region46: #{cnnnet_forward.1} parent=0
    _
  %s10 = ssub.s32 1, %s8
  %s11 = scalar_select 0, %s10, %s8
  $region1: #{cnnnet_forward.1} parent=0
    #allocation2 [shape = 'u8[524288]{0}', space=vmem, size = 0x80000, scoped, tag = 'input window, operand 3, single buffered']
    #allocation3 [shape = 's32[1]{0}', space=sflag, size = 0x4, scoped, tag = 'scoped memory for cnnnet_forward.1']
    #allocation4 [shape = 'u8[131072]{0}', space=vmem, size = 0x20000, scoped, tag = 'input window, operand 5, single buffered']
    #allocation5 [shape = 's32[1]{0}', space=sflag, size = 0x4, scoped, tag = 'scoped memory for cnnnet_forward.1']
    %12 = vsyncpa [#allocation3], 0
    %13 = vsyncpa [#allocation5], 0
    // Predicated region
    $region2: #{cnnnet_forward.1} parent=1 // pred_check
      _
    $region3: #{cnnnet_forward.1} parent=1 // pred_check_branch
      %15 = sbr.rel (0) target = $region5
    $region4: #{cnnnet_forward.1} parent=1 // pred_region
      _
    $region5: #{cnnnet_forward.1} parent=1 // pred_fallthru
      _
    // Predicated region
    $region6: #{cnnnet_forward.1} parent=1 // pred_check
      _
    $region7: #{cnnnet_forward.1} parent=1 // pred_check_branch
      %17 = sbr.rel (0) target = $region9
    $region8: #{cnnnet_forward.1} parent=1 // pred_region
      _
    $region9: #{cnnnet_forward.1} parent=1 // pred_fallthru
      _
    // Predicated region
    $region10: #{cnnnet_forward.1} parent=1 // pred_check
      _
    $region11: #{cnnnet_forward.1} parent=1 // pred_check_branch
      %19 = sbr.rel (0) target = $region13
    $region12: #{cnnnet_forward.1} parent=1 // pred_region
      _
    $region13: #{cnnnet_forward.1} parent=1 // pred_fallthru
      _
    // Predicated region
    $region14: #{cnnnet_forward.1} parent=1 // pred_check
      _
    $region15: #{cnnnet_forward.1} parent=1 // pred_check_branch
      %21 = sbr.rel (0) target = $region17
    $region16: #{cnnnet_forward.1} parent=1 // pred_region
      %23 = vsyncadd [#allocation3], 0
      %s24 = sshll.u32 %s3, 4
      %s25 = int_to_ptr.hbm [resolvable:$true] %s24
      %s26 = sshll.u32 [#allocation2], 4
      %s27 = int_to_ptr.vmem [resolvable:$true] %s26
      %32 = dma.hbm_to_vmem [thread:$0]  %s25, 16384, %s27, [#allocation3], 256, 256, 16
    $region17: #{cnnnet_forward.1} parent=1 // pred_fallthru
      _
    // Predicated region
    $region18: #{cnnnet_forward.1} parent=1 // pred_check
      _
    $region19: #{cnnnet_forward.1} parent=1 // pred_check_branch
      %34 = sbr.rel (0) target = $region21
    $region20: #{cnnnet_forward.1} parent=1 // pred_region
      _
    $region21: #{cnnnet_forward.1} parent=1 // pred_fallthru
      _
    // Predicated region
    $region22: #{cnnnet_forward.1} parent=1 // pred_check
      _
    $region23: #{cnnnet_forward.1} parent=1 // pred_check_branch
      %36 = sbr.rel (0) target = $region25
    $region24: #{cnnnet_forward.1} parent=1 // pred_region
      %38 = vsyncadd [#allocation5], 0
      %s39 = sshll.u32 %s5, 4
      %s40 = int_to_ptr.hbm [resolvable:$true] %s39
      %s41 = sshll.u32 [#allocation4], 4
      %s42 = int_to_ptr.vmem [resolvable:$true] %s41
      %47 = dma.hbm_to_vmem [thread:$0]  %s40, 4096, %s42, [#allocation5], 64, 64, 4
    $region25: #{cnnnet_forward.1} parent=1 // pred_fallthru
      _
    // Predicated region
    $region26: #{cnnnet_forward.1} parent=1 // pred_check
      _
    $region27: #{cnnnet_forward.1} parent=1 // pred_check_branch
      %49 = sbr.rel (0) target = $region29
    $region28: #{cnnnet_forward.1} parent=1 // pred_region
      _
    $region29: #{cnnnet_forward.1} parent=1 // pred_fallthru
      _
    // Predicated region
    $region30: #{cnnnet_forward.1} parent=1 // pred_check
      _
    $region31: #{cnnnet_forward.1} parent=1 // pred_check_branch
      %51 = sbr.rel (0) target = $region33
    $region32: #{cnnnet_forward.1} parent=1 // pred_region
      %53 = dma.done [#allocation3], 16384
    $region33: #{cnnnet_forward.1} parent=1 // pred_fallthru
      _
    // Predicated region
    $region34: #{cnnnet_forward.1} parent=1 // pred_check
      _
    $region35: #{cnnnet_forward.1} parent=1 // pred_check_branch
      %55 = sbr.rel (0) target = $region37
    $region36: #{cnnnet_forward.1} parent=1 // pred_region
      %57 = dma.done [#allocation5], 4096
    $region37: #{cnnnet_forward.1} parent=1 // pred_fallthru
      _
    %v59 = vld [vmem:[%s0] sm:$0xf]
    %v60 = vld [vmem:[%s1] sm:$0xff]
    %v61 = vld [vmem:[%s2] sm:$0xf]
    %v63 = vperm.slane %v61, 0
    %v64 = vperm.slane %v61, 1
    %v65 = vperm.slane %v61, 2
    %v66 = vperm.slane %v61, 3
    %72 = vst [vmem:[#allocation1] ss:$4 sm:$0xff] %v60
    %v73 = vld.sshfl [vmem:[#allocation1] sm:$0xff pattern:$0x73625140]
    %v74 = vld.sshfl [vmem:[#allocation1 + $0x8] sm:$0xff pattern:$0x73625140]
    %v75 = vld.sshfl [vmem:[#allocation1 + $0x10] sm:$0xff pattern:$0x73625140]
    %v76 = vld.sshfl [vmem:[#allocation1 + $0x18] sm:$0xff pattern:$0x73625140]
    %vm77 = vcmask 31744
    %v79 = vsel %vm77, %v59, 0
    %vm81 = vcmask 1041408
    %v82 = vsel %vm81, %v73, 0
    %v84 = vsel %vm81, %v74, 0
    %v86 = vsel %vm81, %v75, 0
    %v88 = vsel %vm81, %v76, 0
    %90 = vmatpush.bf16.msra.mxu0 0
    %91 = vmatpush.bf16.msra.mxu0 0
    %92 = vmatpush.bf16.msra.mxu0 0
    %93 = vmatpush.bf16.msra.mxu0 0
    %94 = vmatpush.bf16.msra.mxu0 0
    %95 = vmatpush.bf16.msra.mxu0 0
    %96 = vmatpush.bf16.msra.mxu0 0
    %97 = vmatpush.bf16.msra.mxu0 %v82
    %98 = vmatmul.bf16.gmra.mxu0 %v79
    %v99 = vpop.f32.mrf.mxu0
    %v100 = vadd.f32 %v63, %v99
    %v101 = vpop.f32.mrf.mxu0
    %102 = vdwg.mxu0
    %103 = vmatpush.bf16.msra.mxu0 0
    %104 = vmatpush.bf16.msra.mxu0 0
    %105 = vmatpush.bf16.msra.mxu0 0
    %106 = vmatpush.bf16.msra.mxu0 0
    %107 = vmatpush.bf16.msra.mxu0 0
    %108 = vmatpush.bf16.msra.mxu0 0
    %109 = vmatpush.bf16.msra.mxu0 0
    %110 = vmatpush.bf16.msra.mxu0 %v84
    %111 = vmatmul.bf16.gmra.mxu0 %v79
    %v112 = vpop.f32.mrf.mxu0
    %v113 = vadd.f32 %v64, %v112
    %v114 = vpop.f32.mrf.mxu0
    %115 = vdwg.mxu0
    %116 = vmatpush.bf16.msra.mxu0 0
    %117 = vmatpush.bf16.msra.mxu0 0
    %118 = vmatpush.bf16.msra.mxu0 0
    %119 = vmatpush.bf16.msra.mxu0 0
    %120 = vmatpush.bf16.msra.mxu0 0
    %121 = vmatpush.bf16.msra.mxu0 0
    %122 = vmatpush.bf16.msra.mxu0 0
    %123 = vmatpush.bf16.msra.mxu0 %v86
    %124 = vmatmul.bf16.gmra.mxu0 %v79
    %v125 = vpop.f32.mrf.mxu0
    %v126 = vadd.f32 %v65, %v125
    %v127 = vpop.f32.mrf.mxu0
    %128 = vdwg.mxu0
    %129 = vmatpush.bf16.msra.mxu0 0
    %130 = vmatpush.bf16.msra.mxu0 0
    %131 = vmatpush.bf16.msra.mxu0 0
    %132 = vmatpush.bf16.msra.mxu0 0
    %133 = vmatpush.bf16.msra.mxu0 0
    %134 = vmatpush.bf16.msra.mxu0 0
    %135 = vmatpush.bf16.msra.mxu0 0
    %136 = vmatpush.bf16.msra.mxu0 %v88
    %137 = vmatmul.bf16.gmra.mxu0 %v79
    %v138 = vpop.f32.mrf.mxu0
    %v139 = vadd.f32 %v66, %v138
    %v140 = vpop.f32.mrf.mxu0
    %141 = vdwg.mxu0
    %v142 = vmax.f32 %v100, 0.0
    %v143 = vmax.f32 %v113, 0.0
    %v144 = vmax.f32 %v126, 0.0
    %v145 = vmax.f32 %v139, 0.0
    %v146 = vpack.c.bf16 %v142, %v142
    %v147 = vpack.c.bf16 %v143, %v143
    %v148 = vpack.c.bf16 %v144, %v144
    %v149 = vpack.c.bf16 %v145, %v145
    %v150 = vld [vmem:[#allocation2] sm:$0xff]
    %v151 = vld [vmem:[#allocation2 + $0x8] sm:$0xff]
    %v152 = vld [vmem:[#allocation2 + $0x10] sm:$0xff]
    %v153 = vld [vmem:[#allocation2 + $0x18] sm:$0xff]
    %v154 = vld [vmem:[#allocation2 + $0x20] sm:$0xff]
    %v155 = vld [vmem:[#allocation2 + $0x28] sm:$0xff]
    %v156 = vld [vmem:[#allocation2 + $0x30] sm:$0xff]
    %v157 = vld [vmem:[#allocation2 + $0x38] sm:$0xff]
    %v158 = vld [vmem:[#allocation2 + $0x40] sm:$0xff]
    %v159 = vld [vmem:[#allocation2 + $0x48] sm:$0xff]
    %v160 = vld [vmem:[#allocation2 + $0x50] sm:$0xff]
    %v161 = vld [vmem:[#allocation2 + $0x58] sm:$0xff]
    %v162 = vld [vmem:[#allocation2 + $0x60] sm:$0xff]
    %v163 = vld [vmem:[#allocation2 + $0x68] sm:$0xff]
    %v164 = vld [vmem:[#allocation2 + $0x70] sm:$0xff]
    %v165 = vld [vmem:[#allocation2 + $0x78] sm:$0xff]
    %v166 = vld [vmem:[#allocation2 + $0x80] sm:$0xff]
    %v167 = vld [vmem:[#allocation2 + $0x88] sm:$0xff]
    %v168 = vld [vmem:[#allocation2 + $0x90] sm:$0xff]
    %v169 = vld [vmem:[#allocation2 + $0x98] sm:$0xff]
    %v170 = vld [vmem:[#allocation2 + $0xa0] sm:$0xff]
    %v171 = vld [vmem:[#allocation2 + $0xa8] sm:$0xff]
    %v172 = vld [vmem:[#allocation2 + $0xb0] sm:$0xff]
    %v173 = vld [vmem:[#allocation2 + $0xb8] sm:$0xff]
    %v174 = vld [vmem:[#allocation2 + $0xc0] sm:$0xff]
    %v175 = vld [vmem:[#allocation2 + $0xc8] sm:$0xff]
    %v176 = vld [vmem:[#allocation2 + $0xd0] sm:$0xff]
    %v177 = vld [vmem:[#allocation2 + $0xd8] sm:$0xff]
    %v178 = vld [vmem:[#allocation2 + $0xe0] sm:$0xff]
    %v179 = vld [vmem:[#allocation2 + $0xe8] sm:$0xff]
    %v180 = vld [vmem:[#allocation2 + $0xf0] sm:$0xff]
    %v181 = vld [vmem:[#allocation2 + $0xf8] sm:$0xff]
    %v182 = vld [vmem:[#allocation2 + $0x100] sm:$0xff]
    %v183 = vld [vmem:[#allocation2 + $0x108] sm:$0xff]
    %v184 = vld [vmem:[#allocation2 + $0x110] sm:$0xff]
    %v185 = vld [vmem:[#allocation2 + $0x118] sm:$0xff]
    %v186 = vld [vmem:[#allocation2 + $0x120] sm:$0xff]
    %v187 = vld [vmem:[#allocation2 + $0x128] sm:$0xff]
    %v188 = vld [vmem:[#allocation2 + $0x130] sm:$0xff]
    %v189 = vld [vmem:[#allocation2 + $0x138] sm:$0xff]
    %v190 = vld [vmem:[#allocation2 + $0x140] sm:$0xff]
    %v191 = vld [vmem:[#allocation2 + $0x148] sm:$0xff]
    %v192 = vld [vmem:[#allocation2 + $0x150] sm:$0xff]
    %v193 = vld [vmem:[#allocation2 + $0x158] sm:$0xff]
    %v194 = vld [vmem:[#allocation2 + $0x160] sm:$0xff]
    %v195 = vld [vmem:[#allocation2 + $0x168] sm:$0xff]
    %v196 = vld [vmem:[#allocation2 + $0x170] sm:$0xff]
    %v197 = vld [vmem:[#allocation2 + $0x178] sm:$0xff]
    %v198 = vld [vmem:[#allocation2 + $0x180] sm:$0xff]
    %v199 = vld [vmem:[#allocation2 + $0x188] sm:$0xff]
    %v200 = vld [vmem:[#allocation2 + $0x190] sm:$0xff]
    %v201 = vld [vmem:[#allocation2 + $0x198] sm:$0xff]
    %v202 = vld [vmem:[#allocation2 + $0x1a0] sm:$0xff]
    %v203 = vld [vmem:[#allocation2 + $0x1a8] sm:$0xff]
    %v204 = vld [vmem:[#allocation2 + $0x1b0] sm:$0xff]
    %v205 = vld [vmem:[#allocation2 + $0x1b8] sm:$0xff]
    %v206 = vld [vmem:[#allocation2 + $0x1c0] sm:$0xff]
    %v207 = vld [vmem:[#allocation2 + $0x1c8] sm:$0xff]
    %v208 = vld [vmem:[#allocation2 + $0x1d0] sm:$0xff]
    %v209 = vld [vmem:[#allocation2 + $0x1d8] sm:$0xff]
    %v210 = vld [vmem:[#allocation2 + $0x1e0] sm:$0xff]
    %v211 = vld [vmem:[#allocation2 + $0x1e8] sm:$0xff]
    %v212 = vld [vmem:[#allocation2 + $0x1f0] sm:$0xff]
    %v213 = vld [vmem:[#allocation2 + $0x1f8] sm:$0xff]
    %v214 = vld [vmem:[#allocation2 + $0x200] sm:$0xff]
    %v215 = vld [vmem:[#allocation2 + $0x208] sm:$0xff]
    %v216 = vld [vmem:[#allocation2 + $0x210] sm:$0xff]
    %v217 = vld [vmem:[#allocation2 + $0x218] sm:$0xff]
    %v218 = vld [vmem:[#allocation2 + $0x220] sm:$0xff]
    %v219 = vld [vmem:[#allocation2 + $0x228] sm:$0xff]
    %v220 = vld [vmem:[#allocation2 + $0x230] sm:$0xff]
    %v221 = vld [vmem:[#allocation2 + $0x238] sm:$0xff]
    %v222 = vld [vmem:[#allocation2 + $0x240] sm:$0xff]
    %v223 = vld [vmem:[#allocation2 + $0x248] sm:$0xff]
    %v224 = vld [vmem:[#allocation2 + $0x250] sm:$0xff]
    %v225 = vld [vmem:[#allocation2 + $0x258] sm:$0xff]
    %v226 = vld [vmem:[#allocation2 + $0x260] sm:$0xff]
    %v227 = vld [vmem:[#allocation2 + $0x268] sm:$0xff]
    %v228 = vld [vmem:[#allocation2 + $0x270] sm:$0xff]
    %v229 = vld [vmem:[#allocation2 + $0x278] sm:$0xff]
    %v230 = vld [vmem:[#allocation2 + $0x280] sm:$0xff]
    %v231 = vld [vmem:[#allocation2 + $0x288] sm:$0xff]
    %v232 = vld [vmem:[#allocation2 + $0x290] sm:$0xff]
    %v233 = vld [vmem:[#allocation2 + $0x298] sm:$0xff]
    %v234 = vld [vmem:[#allocation2 + $0x2a0] sm:$0xff]
    %v235 = vld [vmem:[#allocation2 + $0x2a8] sm:$0xff]
    %v236 = vld [vmem:[#allocation2 + $0x2b0] sm:$0xff]
    %v237 = vld [vmem:[#allocation2 + $0x2b8] sm:$0xff]
    %v238 = vld [vmem:[#allocation2 + $0x2c0] sm:$0xff]
    %v239 = vld [vmem:[#allocation2 + $0x2c8] sm:$0xff]
    %v240 = vld [vmem:[#allocation2 + $0x2d0] sm:$0xff]
    %v241 = vld [vmem:[#allocation2 + $0x2d8] sm:$0xff]
    %v242 = vld [vmem:[#allocation2 + $0x2e0] sm:$0xff]
    %v243 = vld [vmem:[#allocation2 + $0x2e8] sm:$0xff]
    %v244 = vld [vmem:[#allocation2 + $0x2f0] sm:$0xff]
    %v245 = vld [vmem:[#allocation2 + $0x2f8] sm:$0xff]
    %v246 = vld [vmem:[#allocation2 + $0x300] sm:$0xff]
    %v247 = vld [vmem:[#allocation2 + $0x308] sm:$0xff]
    %v248 = vld [vmem:[#allocation2 + $0x310] sm:$0xff]
    %v249 = vld [vmem:[#allocation2 + $0x318] sm:$0xff]
    %v250 = vld [vmem:[#allocation2 + $0x320] sm:$0xff]
    %v251 = vld [vmem:[#allocation2 + $0x328] sm:$0xff]
    %v252 = vld [vmem:[#allocation2 + $0x330] sm:$0xff]
    %v253 = vld [vmem:[#allocation2 + $0x338] sm:$0xff]
    %v254 = vld [vmem:[#allocation2 + $0x340] sm:$0xff]
    %v255 = vld [vmem:[#allocation2 + $0x348] sm:$0xff]
    %v256 = vld [vmem:[#allocation2 + $0x350] sm:$0xff]
    %v257 = vld [vmem:[#allocation2 + $0x358] sm:$0xff]
    %v258 = vld [vmem:[#allocation2 + $0x360] sm:$0xff]
    %v259 = vld [vmem:[#allocation2 + $0x368] sm:$0xff]
    %v260 = vld [vmem:[#allocation2 + $0x370] sm:$0xff]
    %v261 = vld [vmem:[#allocation2 + $0x378] sm:$0xff]
    %v262 = vld [vmem:[#allocation2 + $0x380] sm:$0xff]
    %v263 = vld [vmem:[#allocation2 + $0x388] sm:$0xff]
    %v264 = vld [vmem:[#allocation2 + $0x390] sm:$0xff]
    %v265 = vld [vmem:[#allocation2 + $0x398] sm:$0xff]
    %v266 = vld [vmem:[#allocation2 + $0x3a0] sm:$0xff]
    %v267 = vld [vmem:[#allocation2 + $0x3a8] sm:$0xff]
    %v268 = vld [vmem:[#allocation2 + $0x3b0] sm:$0xff]
    %v269 = vld [vmem:[#allocation2 + $0x3b8] sm:$0xff]
    %v270 = vld [vmem:[#allocation2 + $0x3c0] sm:$0xff]
    %v271 = vld [vmem:[#allocation2 + $0x3c8] sm:$0xff]
    %v272 = vld [vmem:[#allocation2 + $0x3d0] sm:$0xff]
    %v273 = vld [vmem:[#allocation2 + $0x3d8] sm:$0xff]
    %v274 = vld [vmem:[#allocation2 + $0x3e0] sm:$0xff]
    %v275 = vld [vmem:[#allocation2 + $0x3e8] sm:$0xff]
    %v276 = vld [vmem:[#allocation2 + $0x3f0] sm:$0xff]
    %v277 = vld [vmem:[#allocation2 + $0x3f8] sm:$0xff]
    %v278 = vld [vmem:[%s4] sm:$0xf]
    %v280 = vperm.slane %v278, 0
    %v281 = vperm.slane %v278, 1
    %v282 = vperm.slane %v278, 2
    %v283 = vperm.slane %v278, 3
    %v416 = vunpack.c.l.b16 %v150
    %v417 = vunpack.c.h.b16 %v150
    %v418 = vunpack.c.l.b16 %v151
    %v419 = vunpack.c.h.b16 %v151
    %v420 = vunpack.c.l.b16 %v152
    %v421 = vunpack.c.h.b16 %v152
    %v422 = vunpack.c.l.b16 %v153
    %v423 = vunpack.c.h.b16 %v153
    %v424 = vunpack.c.l.b16 %v154
    %v425 = vunpack.c.h.b16 %v154
    %v426 = vunpack.c.l.b16 %v155
    %v427 = vunpack.c.h.b16 %v155
    %v428 = vunpack.c.l.b16 %v156
    %v429 = vunpack.c.h.b16 %v156
    %v430 = vunpack.c.l.b16 %v157
    %v431 = vunpack.c.h.b16 %v157
    %v432 = vunpack.c.l.b16 %v158
    %v433 = vunpack.c.h.b16 %v158
    %v434 = vunpack.c.l.b16 %v159
    %v435 = vunpack.c.h.b16 %v159
    %v436 = vunpack.c.l.b16 %v160
    %v437 = vunpack.c.h.b16 %v160
    %v438 = vunpack.c.l.b16 %v161
    %v439 = vunpack.c.h.b16 %v161
    %v440 = vunpack.c.l.b16 %v162
    %v441 = vunpack.c.h.b16 %v162
    %v442 = vunpack.c.l.b16 %v163
    %v443 = vunpack.c.h.b16 %v163
    %v444 = vunpack.c.l.b16 %v164
    %v445 = vunpack.c.h.b16 %v164
    %v446 = vunpack.c.l.b16 %v165
    %v447 = vunpack.c.h.b16 %v165
    %v448 = vunpack.c.l.b16 %v166
    %v449 = vunpack.c.h.b16 %v166
    %v450 = vunpack.c.l.b16 %v167
    %v451 = vunpack.c.h.b16 %v167
    %v452 = vunpack.c.l.b16 %v168
    %v453 = vunpack.c.h.b16 %v168
    %v454 = vunpack.c.l.b16 %v169
    %v455 = vunpack.c.h.b16 %v169
    %v456 = vunpack.c.l.b16 %v170
    %v457 = vunpack.c.h.b16 %v170
    %v458 = vunpack.c.l.b16 %v171
    %v459 = vunpack.c.h.b16 %v171
    %v460 = vunpack.c.l.b16 %v172
    %v461 = vunpack.c.h.b16 %v172
    %v462 = vunpack.c.l.b16 %v173
    %v463 = vunpack.c.h.b16 %v173
    %v464 = vunpack.c.l.b16 %v174
    %v465 = vunpack.c.h.b16 %v174
    %v466 = vunpack.c.l.b16 %v175
    %v467 = vunpack.c.h.b16 %v175
    %v468 = vunpack.c.l.b16 %v176
    %v469 = vunpack.c.h.b16 %v176
    %v470 = vunpack.c.l.b16 %v177
    %v471 = vunpack.c.h.b16 %v177
    %v472 = vunpack.c.l.b16 %v178
    %v473 = vunpack.c.h.b16 %v178
    %v474 = vunpack.c.l.b16 %v179
    %v475 = vunpack.c.h.b16 %v179
    %v476 = vunpack.c.l.b16 %v180
    %v477 = vunpack.c.h.b16 %v180
    %v478 = vunpack.c.l.b16 %v181
    %v479 = vunpack.c.h.b16 %v181
    %v480 = vunpack.c.l.b16 %v182
    %v481 = vunpack.c.h.b16 %v182
    %v482 = vunpack.c.l.b16 %v183
    %v483 = vunpack.c.h.b16 %v183
    %v484 = vunpack.c.l.b16 %v184
    %v485 = vunpack.c.h.b16 %v184
    %v486 = vunpack.c.l.b16 %v185
    %v487 = vunpack.c.h.b16 %v185
    %v488 = vunpack.c.l.b16 %v186
    %v489 = vunpack.c.h.b16 %v186
    %v490 = vunpack.c.l.b16 %v187
    %v491 = vunpack.c.h.b16 %v187
    %v492 = vunpack.c.l.b16 %v188
    %v493 = vunpack.c.h.b16 %v188
    %v494 = vunpack.c.l.b16 %v189
    %v495 = vunpack.c.h.b16 %v189
    %v496 = vunpack.c.l.b16 %v190
    %v497 = vunpack.c.h.b16 %v190
    %v498 = vunpack.c.l.b16 %v191
    %v499 = vunpack.c.h.b16 %v191
    %v500 = vunpack.c.l.b16 %v192
    %v501 = vunpack.c.h.b16 %v192
    %v502 = vunpack.c.l.b16 %v193
    %v503 = vunpack.c.h.b16 %v193
    %v504 = vunpack.c.l.b16 %v194
    %v505 = vunpack.c.h.b16 %v194
    %v506 = vunpack.c.l.b16 %v195
    %v507 = vunpack.c.h.b16 %v195
    %v508 = vunpack.c.l.b16 %v196
    %v509 = vunpack.c.h.b16 %v196
    %v510 = vunpack.c.l.b16 %v197
    %v511 = vunpack.c.h.b16 %v197
    %v512 = vunpack.c.l.b16 %v198
    %v513 = vunpack.c.h.b16 %v198
    %v514 = vunpack.c.l.b16 %v199
    %v515 = vunpack.c.h.b16 %v199
    %v516 = vunpack.c.l.b16 %v200
    %v517 = vunpack.c.h.b16 %v200
    %v518 = vunpack.c.l.b16 %v201
    %v519 = vunpack.c.h.b16 %v201
    %v520 = vunpack.c.l.b16 %v202
    %v521 = vunpack.c.h.b16 %v202
    %v522 = vunpack.c.l.b16 %v203
    %v523 = vunpack.c.h.b16 %v203
    %v524 = vunpack.c.l.b16 %v204
    %v525 = vunpack.c.h.b16 %v204
    %v526 = vunpack.c.l.b16 %v205
    %v527 = vunpack.c.h.b16 %v205
    %v528 = vunpack.c.l.b16 %v206
    %v529 = vunpack.c.h.b16 %v206
    %v530 = vunpack.c.l.b16 %v207
    %v531 = vunpack.c.h.b16 %v207
    %v532 = vunpack.c.l.b16 %v208
    %v533 = vunpack.c.h.b16 %v208
    %v534 = vunpack.c.l.b16 %v209
    %v535 = vunpack.c.h.b16 %v209
    %v536 = vunpack.c.l.b16 %v210
    %v537 = vunpack.c.h.b16 %v210
    %v538 = vunpack.c.l.b16 %v211
    %v539 = vunpack.c.h.b16 %v211
    %v540 = vunpack.c.l.b16 %v212
    %v541 = vunpack.c.h.b16 %v212
    %v542 = vunpack.c.l.b16 %v213
    %v543 = vunpack.c.h.b16 %v213
    %v544 = vunpack.c.l.b16 %v214
    %v545 = vunpack.c.h.b16 %v214
    %v546 = vunpack.c.l.b16 %v215
    %v547 = vunpack.c.h.b16 %v215
    %v548 = vunpack.c.l.b16 %v216
    %v549 = vunpack.c.h.b16 %v216
    %v550 = vunpack.c.l.b16 %v217
    %v551 = vunpack.c.h.b16 %v217
    %v552 = vunpack.c.l.b16 %v218
    %v553 = vunpack.c.h.b16 %v218
    %v554 = vunpack.c.l.b16 %v219
    %v555 = vunpack.c.h.b16 %v219
    %v556 = vunpack.c.l.b16 %v220
    %v557 = vunpack.c.h.b16 %v220
    %v558 = vunpack.c.l.b16 %v221
    %v559 = vunpack.c.h.b16 %v221
    %v560 = vunpack.c.l.b16 %v222
    %v561 = vunpack.c.h.b16 %v222
    %v562 = vunpack.c.l.b16 %v223
    %v563 = vunpack.c.h.b16 %v223
    %v564 = vunpack.c.l.b16 %v224
    %v565 = vunpack.c.h.b16 %v224
    %v566 = vunpack.c.l.b16 %v225
    %v567 = vunpack.c.h.b16 %v225
    %v568 = vunpack.c.l.b16 %v226
    %v569 = vunpack.c.h.b16 %v226
    %v570 = vunpack.c.l.b16 %v227
    %v571 = vunpack.c.h.b16 %v227
    %v572 = vunpack.c.l.b16 %v228
    %v573 = vunpack.c.h.b16 %v228
    %v574 = vunpack.c.l.b16 %v229
    %v575 = vunpack.c.h.b16 %v229
    %v576 = vunpack.c.l.b16 %v230
    %v577 = vunpack.c.h.b16 %v230
    %v578 = vunpack.c.l.b16 %v231
    %v579 = vunpack.c.h.b16 %v231
    %v580 = vunpack.c.l.b16 %v232
    %v581 = vunpack.c.h.b16 %v232
    %v582 = vunpack.c.l.b16 %v233
    %v583 = vunpack.c.h.b16 %v233
    %v584 = vunpack.c.l.b16 %v234
    %v585 = vunpack.c.h.b16 %v234
    %v586 = vunpack.c.l.b16 %v235
    %v587 = vunpack.c.h.b16 %v235
    %v588 = vunpack.c.l.b16 %v236
    %v589 = vunpack.c.h.b16 %v236
    %v590 = vunpack.c.l.b16 %v237
    %v591 = vunpack.c.h.b16 %v237
    %v592 = vunpack.c.l.b16 %v238
    %v593 = vunpack.c.h.b16 %v238
    %v594 = vunpack.c.l.b16 %v239
    %v595 = vunpack.c.h.b16 %v239
    %v596 = vunpack.c.l.b16 %v240
    %v597 = vunpack.c.h.b16 %v240
    %v598 = vunpack.c.l.b16 %v241
    %v599 = vunpack.c.h.b16 %v241
    %v600 = vunpack.c.l.b16 %v242
    %v601 = vunpack.c.h.b16 %v242
    %v602 = vunpack.c.l.b16 %v243
    %v603 = vunpack.c.h.b16 %v243
    %v604 = vunpack.c.l.b16 %v244
    %v605 = vunpack.c.h.b16 %v244
    %v606 = vunpack.c.l.b16 %v245
    %v607 = vunpack.c.h.b16 %v245
    %v608 = vunpack.c.l.b16 %v246
    %v609 = vunpack.c.h.b16 %v246
    %v610 = vunpack.c.l.b16 %v247
    %v611 = vunpack.c.h.b16 %v247
    %v612 = vunpack.c.l.b16 %v248
    %v613 = vunpack.c.h.b16 %v248
    %v614 = vunpack.c.l.b16 %v249
    %v615 = vunpack.c.h.b16 %v249
    %v616 = vunpack.c.l.b16 %v250
    %v617 = vunpack.c.h.b16 %v250
    %v618 = vunpack.c.l.b16 %v251
    %v619 = vunpack.c.h.b16 %v251
    %v620 = vunpack.c.l.b16 %v252
    %v621 = vunpack.c.h.b16 %v252
    %v622 = vunpack.c.l.b16 %v253
    %v623 = vunpack.c.h.b16 %v253
    %v624 = vunpack.c.l.b16 %v254
    %v625 = vunpack.c.h.b16 %v254
    %v626 = vunpack.c.l.b16 %v255
    %v627 = vunpack.c.h.b16 %v255
    %v628 = vunpack.c.l.b16 %v256
    %v629 = vunpack.c.h.b16 %v256
    %v630 = vunpack.c.l.b16 %v257
    %v631 = vunpack.c.h.b16 %v257
    %v632 = vunpack.c.l.b16 %v258
    %v633 = vunpack.c.h.b16 %v258
    %v634 = vunpack.c.l.b16 %v259
    %v635 = vunpack.c.h.b16 %v259
    %v636 = vunpack.c.l.b16 %v260
    %v637 = vunpack.c.h.b16 %v260
    %v638 = vunpack.c.l.b16 %v261
    %v639 = vunpack.c.h.b16 %v261
    %v640 = vunpack.c.l.b16 %v262
    %v641 = vunpack.c.h.b16 %v262
    %v642 = vunpack.c.l.b16 %v263
    %v643 = vunpack.c.h.b16 %v263
    %v644 = vunpack.c.l.b16 %v264
    %v645 = vunpack.c.h.b16 %v264
    %v646 = vunpack.c.l.b16 %v265
    %v647 = vunpack.c.h.b16 %v265
    %v648 = vunpack.c.l.b16 %v266
    %v649 = vunpack.c.h.b16 %v266
    %v650 = vunpack.c.l.b16 %v267
    %v651 = vunpack.c.h.b16 %v267
    %v652 = vunpack.c.l.b16 %v268
    %v653 = vunpack.c.h.b16 %v268
    %v654 = vunpack.c.l.b16 %v269
    %v655 = vunpack.c.h.b16 %v269
    %v656 = vunpack.c.l.b16 %v270
    %v657 = vunpack.c.h.b16 %v270
    %v658 = vunpack.c.l.b16 %v271
    %v659 = vunpack.c.h.b16 %v271
    %v660 = vunpack.c.l.b16 %v272
    %v661 = vunpack.c.h.b16 %v272
    %v662 = vunpack.c.l.b16 %v273
    %v663 = vunpack.c.h.b16 %v273
    %v664 = vunpack.c.l.b16 %v274
    %v665 = vunpack.c.h.b16 %v274
    %v666 = vunpack.c.l.b16 %v275
    %v667 = vunpack.c.h.b16 %v275
    %v668 = vunpack.c.l.b16 %v276
    %v669 = vunpack.c.h.b16 %v276
    %v670 = vunpack.c.l.b16 %v277
    %v671 = vunpack.c.h.b16 %v277
    %v672 = vpack.c.b16 %v420, %v416
    %v673 = vpack.c.b16 %v421, %v417
    %v674 = vpack.c.b16 %v422, %v418
    %v675 = vpack.c.b16 %v423, %v419
    %v676 = vpack.c.b16 %v428, %v424
    %v677 = vpack.c.b16 %v429, %v425
    %v678 = vpack.c.b16 %v430, %v426
    %v679 = vpack.c.b16 %v431, %v427
    %v680 = vpack.c.b16 %v436, %v432
    %v681 = vpack.c.b16 %v437, %v433
    %v682 = vpack.c.b16 %v438, %v434
    %v683 = vpack.c.b16 %v439, %v435
    %v684 = vpack.c.b16 %v444, %v440
    %v685 = vpack.c.b16 %v445, %v441
    %v686 = vpack.c.b16 %v446, %v442
    %v687 = vpack.c.b16 %v447, %v443
    %v688 = vpack.c.b16 %v452, %v448
    %v689 = vpack.c.b16 %v453, %v449
    %v690 = vpack.c.b16 %v454, %v450
    %v691 = vpack.c.b16 %v455, %v451
    %v692 = vpack.c.b16 %v460, %v456
    %v693 = vpack.c.b16 %v461, %v457
    %v694 = vpack.c.b16 %v462, %v458
    %v695 = vpack.c.b16 %v463, %v459
    %v696 = vpack.c.b16 %v468, %v464
    %v697 = vpack.c.b16 %v469, %v465
    %v698 = vpack.c.b16 %v470, %v466
    %v699 = vpack.c.b16 %v471, %v467
    %v700 = vpack.c.b16 %v476, %v472
    %v701 = vpack.c.b16 %v477, %v473
    %v702 = vpack.c.b16 %v478, %v474
    %v703 = vpack.c.b16 %v479, %v475
    %v704 = vpack.c.b16 %v484, %v480
    %v705 = vpack.c.b16 %v485, %v481
    %v706 = vpack.c.b16 %v486, %v482
    %v707 = vpack.c.b16 %v487, %v483
    %v708 = vpack.c.b16 %v492, %v488
    %v709 = vpack.c.b16 %v493, %v489
    %v710 = vpack.c.b16 %v494, %v490
    %v711 = vpack.c.b16 %v495, %v491
    %v712 = vpack.c.b16 %v500, %v496
    %v713 = vpack.c.b16 %v501, %v497
    %v714 = vpack.c.b16 %v502, %v498
    %v715 = vpack.c.b16 %v503, %v499
    %v716 = vpack.c.b16 %v508, %v504
    %v717 = vpack.c.b16 %v509, %v505
    %v718 = vpack.c.b16 %v510, %v506
    %v719 = vpack.c.b16 %v511, %v507
    %v720 = vpack.c.b16 %v516, %v512
    %v721 = vpack.c.b16 %v517, %v513
    %v722 = vpack.c.b16 %v518, %v514
    %v723 = vpack.c.b16 %v519, %v515
    %v724 = vpack.c.b16 %v524, %v520
    %v725 = vpack.c.b16 %v525, %v521
    %v726 = vpack.c.b16 %v526, %v522
    %v727 = vpack.c.b16 %v527, %v523
    %v728 = vpack.c.b16 %v532, %v528
    %v729 = vpack.c.b16 %v533, %v529
    %v730 = vpack.c.b16 %v534, %v530
    %v731 = vpack.c.b16 %v535, %v531
    %v732 = vpack.c.b16 %v540, %v536
    %v733 = vpack.c.b16 %v541, %v537
    %v734 = vpack.c.b16 %v542, %v538
    %v735 = vpack.c.b16 %v543, %v539
    %v736 = vpack.c.b16 %v548, %v544
    %v737 = vpack.c.b16 %v549, %v545
    %v738 = vpack.c.b16 %v550, %v546
    %v739 = vpack.c.b16 %v551, %v547
    %v740 = vpack.c.b16 %v556, %v552
    %v741 = vpack.c.b16 %v557, %v553
    %v742 = vpack.c.b16 %v558, %v554
    %v743 = vpack.c.b16 %v559, %v555
    %v744 = vpack.c.b16 %v564, %v560
    %v745 = vpack.c.b16 %v565, %v561
    %v746 = vpack.c.b16 %v566, %v562
    %v747 = vpack.c.b16 %v567, %v563
    %v748 = vpack.c.b16 %v572, %v568
    %v749 = vpack.c.b16 %v573, %v569
    %v750 = vpack.c.b16 %v574, %v570
    %v751 = vpack.c.b16 %v575, %v571
    %v752 = vpack.c.b16 %v580, %v576
    %v753 = vpack.c.b16 %v581, %v577
    %v754 = vpack.c.b16 %v582, %v578
    %v755 = vpack.c.b16 %v583, %v579
    %v756 = vpack.c.b16 %v588, %v584
    %v757 = vpack.c.b16 %v589, %v585
    %v758 = vpack.c.b16 %v590, %v586
    %v759 = vpack.c.b16 %v591, %v587
    %v760 = vpack.c.b16 %v596, %v592
    %v761 = vpack.c.b16 %v597, %v593
    %v762 = vpack.c.b16 %v598, %v594
    %v763 = vpack.c.b16 %v599, %v595
    %v764 = vpack.c.b16 %v604, %v600
    %v765 = vpack.c.b16 %v605, %v601
    %v766 = vpack.c.b16 %v606, %v602
    %v767 = vpack.c.b16 %v607, %v603
    %v768 = vpack.c.b16 %v612, %v608
    %v769 = vpack.c.b16 %v613, %v609
    %v770 = vpack.c.b16 %v614, %v610
    %v771 = vpack.c.b16 %v615, %v611
    %v772 = vpack.c.b16 %v620, %v616
    %v773 = vpack.c.b16 %v621, %v617
    %v774 = vpack.c.b16 %v622, %v618
    %v775 = vpack.c.b16 %v623, %v619
    %v776 = vpack.c.b16 %v628, %v624
    %v777 = vpack.c.b16 %v629, %v625
    %v778 = vpack.c.b16 %v630, %v626
    %v779 = vpack.c.b16 %v631, %v627
    %v780 = vpack.c.b16 %v636, %v632
    %v781 = vpack.c.b16 %v637, %v633
    %v782 = vpack.c.b16 %v638, %v634
    %v783 = vpack.c.b16 %v639, %v635
    %v784 = vpack.c.b16 %v644, %v640
    %v785 = vpack.c.b16 %v645, %v641
    %v786 = vpack.c.b16 %v646, %v642
    %v787 = vpack.c.b16 %v647, %v643
    %v788 = vpack.c.b16 %v652, %v648
    %v789 = vpack.c.b16 %v653, %v649
    %v790 = vpack.c.b16 %v654, %v650
    %v791 = vpack.c.b16 %v655, %v651
    %v792 = vpack.c.b16 %v660, %v656
    %v793 = vpack.c.b16 %v661, %v657
    %v794 = vpack.c.b16 %v662, %v658
    %v795 = vpack.c.b16 %v663, %v659
    %v796 = vpack.c.b16 %v668, %v664
    %v797 = vpack.c.b16 %v669, %v665
    %v798 = vpack.c.b16 %v670, %v666
    %v799 = vpack.c.b16 %v671, %v667
    %928 = vmatpush.bf16.msra.mxu0 %v700
    %929 = vmatpush.bf16.msra.mxu0 %v696
    %930 = vmatpush.bf16.msra.mxu0 %v692
    %931 = vmatpush.bf16.msra.mxu0 %v688
    %932 = vmatpush.bf16.msra.mxu0 %v684
    %933 = vmatpush.bf16.msra.mxu0 %v680
    %934 = vmatpush.bf16.msra.mxu0 %v676
    %935 = vmatpush.bf16.msra.mxu0 %v672
    %936 = vmatmul.bf16.gmra.mxu0 %v146
    %v937 = vpop.f32.mrf.mxu0
    %v938 = vadd.f32 %v280, %v937
    %v939 = vpop.f32.mrf.mxu0
    %940 = vdwg.mxu0
    %941 = vmatpush.bf16.msra.mxu0 %v732
    %942 = vmatpush.bf16.msra.mxu0 %v728
    %943 = vmatpush.bf16.msra.mxu0 %v724
    %944 = vmatpush.bf16.msra.mxu0 %v720
    %945 = vmatpush.bf16.msra.mxu0 %v716
    %946 = vmatpush.bf16.msra.mxu0 %v712
    %947 = vmatpush.bf16.msra.mxu0 %v708
    %948 = vmatpush.bf16.msra.mxu0 %v704
    %949 = vmatmul.bf16.gmra.mxu0 %v147
    %v950 = vpop.f32.mrf.mxu0
    %v951 = vadd.f32 %v938, %v950
    %v952 = vpop.f32.mrf.mxu0
    %953 = vdwg.mxu0
    %954 = vmatpush.bf16.msra.mxu0 %v764
    %955 = vmatpush.bf16.msra.mxu0 %v760
    %956 = vmatpush.bf16.msra.mxu0 %v756
    %957 = vmatpush.bf16.msra.mxu0 %v752
    %958 = vmatpush.bf16.msra.mxu0 %v748
    %959 = vmatpush.bf16.msra.mxu0 %v744
    %960 = vmatpush.bf16.msra.mxu0 %v740
    %961 = vmatpush.bf16.msra.mxu0 %v736
    %962 = vmatmul.bf16.gmra.mxu0 %v148
    %v963 = vpop.f32.mrf.mxu0
    %v964 = vadd.f32 %v951, %v963
    %v965 = vpop.f32.mrf.mxu0
    %966 = vdwg.mxu0
    %967 = vmatpush.bf16.msra.mxu0 %v796
    %968 = vmatpush.bf16.msra.mxu0 %v792
    %969 = vmatpush.bf16.msra.mxu0 %v788
    %970 = vmatpush.bf16.msra.mxu0 %v784
    %971 = vmatpush.bf16.msra.mxu0 %v780
    %972 = vmatpush.bf16.msra.mxu0 %v776
    %973 = vmatpush.bf16.msra.mxu0 %v772
    %974 = vmatpush.bf16.msra.mxu0 %v768
    %975 = vmatmul.bf16.gmra.mxu0 %v149
    %v976 = vpop.f32.mrf.mxu0
    %v977 = vadd.f32 %v964, %v976
    %v978 = vpop.f32.mrf.mxu0
    %979 = vdwg.mxu0
    %980 = vmatpush.bf16.msra.mxu0 %v701
    %981 = vmatpush.bf16.msra.mxu0 %v697
    %982 = vmatpush.bf16.msra.mxu0 %v693
    %983 = vmatpush.bf16.msra.mxu0 %v689
    %984 = vmatpush.bf16.msra.mxu0 %v685
    %985 = vmatpush.bf16.msra.mxu0 %v681
    %986 = vmatpush.bf16.msra.mxu0 %v677
    %987 = vmatpush.bf16.msra.mxu0 %v673
    %988 = vmatmul.bf16.gmra.mxu0 %v146
    %v989 = vpop.f32.mrf.mxu0
    %v990 = vadd.f32 %v281, %v989
    %v991 = vpop.f32.mrf.mxu0
    %992 = vdwg.mxu0
    %993 = vmatpush.bf16.msra.mxu0 %v733
    %994 = vmatpush.bf16.msra.mxu0 %v729
    %995 = vmatpush.bf16.msra.mxu0 %v725
    %996 = vmatpush.bf16.msra.mxu0 %v721
    %997 = vmatpush.bf16.msra.mxu0 %v717
    %998 = vmatpush.bf16.msra.mxu0 %v713
    %999 = vmatpush.bf16.msra.mxu0 %v709
    %1000 = vmatpush.bf16.msra.mxu0 %v705
    %1001 = vmatmul.bf16.gmra.mxu0 %v147
    %v1002 = vpop.f32.mrf.mxu0
    %v1003 = vadd.f32 %v990, %v1002
    %v1004 = vpop.f32.mrf.mxu0
    %1005 = vdwg.mxu0
    %1006 = vmatpush.bf16.msra.mxu0 %v765
    %1007 = vmatpush.bf16.msra.mxu0 %v761
    %1008 = vmatpush.bf16.msra.mxu0 %v757
    %1009 = vmatpush.bf16.msra.mxu0 %v753
    %1010 = vmatpush.bf16.msra.mxu0 %v749
    %1011 = vmatpush.bf16.msra.mxu0 %v745
    %1012 = vmatpush.bf16.msra.mxu0 %v741
    %1013 = vmatpush.bf16.msra.mxu0 %v737
    %1014 = vmatmul.bf16.gmra.mxu0 %v148
    %v1015 = vpop.f32.mrf.mxu0
    %v1016 = vadd.f32 %v1003, %v1015
    %v1017 = vpop.f32.mrf.mxu0
    %1018 = vdwg.mxu0
    %1019 = vmatpush.bf16.msra.mxu0 %v797
    %1020 = vmatpush.bf16.msra.mxu0 %v793
    %1021 = vmatpush.bf16.msra.mxu0 %v789
    %1022 = vmatpush.bf16.msra.mxu0 %v785
    %1023 = vmatpush.bf16.msra.mxu0 %v781
    %1024 = vmatpush.bf16.msra.mxu0 %v777
    %1025 = vmatpush.bf16.msra.mxu0 %v773
    %1026 = vmatpush.bf16.msra.mxu0 %v769
    %1027 = vmatmul.bf16.gmra.mxu0 %v149
    %v1028 = vpop.f32.mrf.mxu0
    %v1029 = vadd.f32 %v1016, %v1028
    %v1030 = vpop.f32.mrf.mxu0
    %1031 = vdwg.mxu0
    %1032 = vmatpush.bf16.msra.mxu0 %v702
    %1033 = vmatpush.bf16.msra.mxu0 %v698
    %1034 = vmatpush.bf16.msra.mxu0 %v694
    %1035 = vmatpush.bf16.msra.mxu0 %v690
    %1036 = vmatpush.bf16.msra.mxu0 %v686
    %1037 = vmatpush.bf16.msra.mxu0 %v682
    %1038 = vmatpush.bf16.msra.mxu0 %v678
    %1039 = vmatpush.bf16.msra.mxu0 %v674
    %1040 = vmatmul.bf16.gmra.mxu0 %v146
    %v1041 = vpop.f32.mrf.mxu0
    %v1042 = vadd.f32 %v282, %v1041
    %v1043 = vpop.f32.mrf.mxu0
    %1044 = vdwg.mxu0
    %1045 = vmatpush.bf16.msra.mxu0 %v734
    %1046 = vmatpush.bf16.msra.mxu0 %v730
    %1047 = vmatpush.bf16.msra.mxu0 %v726
    %1048 = vmatpush.bf16.msra.mxu0 %v722
    %1049 = vmatpush.bf16.msra.mxu0 %v718
    %1050 = vmatpush.bf16.msra.mxu0 %v714
    %1051 = vmatpush.bf16.msra.mxu0 %v710
    %1052 = vmatpush.bf16.msra.mxu0 %v706
    %1053 = vmatmul.bf16.gmra.mxu0 %v147
    %v1054 = vpop.f32.mrf.mxu0
    %v1055 = vadd.f32 %v1042, %v1054
    %v1056 = vpop.f32.mrf.mxu0
    %1057 = vdwg.mxu0
    %1058 = vmatpush.bf16.msra.mxu0 %v766
    %1059 = vmatpush.bf16.msra.mxu0 %v762
    %1060 = vmatpush.bf16.msra.mxu0 %v758
    %1061 = vmatpush.bf16.msra.mxu0 %v754
    %1062 = vmatpush.bf16.msra.mxu0 %v750
    %1063 = vmatpush.bf16.msra.mxu0 %v746
    %1064 = vmatpush.bf16.msra.mxu0 %v742
    %1065 = vmatpush.bf16.msra.mxu0 %v738
    %1066 = vmatmul.bf16.gmra.mxu0 %v148
    %v1067 = vpop.f32.mrf.mxu0
    %v1068 = vadd.f32 %v1055, %v1067
    %v1069 = vpop.f32.mrf.mxu0
    %1070 = vdwg.mxu0
    %1071 = vmatpush.bf16.msra.mxu0 %v798
    %1072 = vmatpush.bf16.msra.mxu0 %v794
    %1073 = vmatpush.bf16.msra.mxu0 %v790
    %1074 = vmatpush.bf16.msra.mxu0 %v786
    %1075 = vmatpush.bf16.msra.mxu0 %v782
    %1076 = vmatpush.bf16.msra.mxu0 %v778
    %1077 = vmatpush.bf16.msra.mxu0 %v774
    %1078 = vmatpush.bf16.msra.mxu0 %v770
    %1079 = vmatmul.bf16.gmra.mxu0 %v149
    %v1080 = vpop.f32.mrf.mxu0
    %v1081 = vadd.f32 %v1068, %v1080
    %v1082 = vpop.f32.mrf.mxu0
    %1083 = vdwg.mxu0
    %1084 = vmatpush.bf16.msra.mxu0 %v703
    %1085 = vmatpush.bf16.msra.mxu0 %v699
    %1086 = vmatpush.bf16.msra.mxu0 %v695
    %1087 = vmatpush.bf16.msra.mxu0 %v691
    %1088 = vmatpush.bf16.msra.mxu0 %v687
    %1089 = vmatpush.bf16.msra.mxu0 %v683
    %1090 = vmatpush.bf16.msra.mxu0 %v679
    %1091 = vmatpush.bf16.msra.mxu0 %v675
    %1092 = vmatmul.bf16.gmra.mxu0 %v146
    %v1093 = vpop.f32.mrf.mxu0
    %v1094 = vadd.f32 %v283, %v1093
    %v1095 = vpop.f32.mrf.mxu0
    %1096 = vdwg.mxu0
    %1097 = vmatpush.bf16.msra.mxu0 %v735
    %1098 = vmatpush.bf16.msra.mxu0 %v731
    %1099 = vmatpush.bf16.msra.mxu0 %v727
    %1100 = vmatpush.bf16.msra.mxu0 %v723
    %1101 = vmatpush.bf16.msra.mxu0 %v719
    %1102 = vmatpush.bf16.msra.mxu0 %v715
    %1103 = vmatpush.bf16.msra.mxu0 %v711
    %1104 = vmatpush.bf16.msra.mxu0 %v707
    %1105 = vmatmul.bf16.gmra.mxu0 %v147
    %v1106 = vpop.f32.mrf.mxu0
    %v1107 = vadd.f32 %v1094, %v1106
    %v1108 = vpop.f32.mrf.mxu0
    %1109 = vdwg.mxu0
    %1110 = vmatpush.bf16.msra.mxu0 %v767
    %1111 = vmatpush.bf16.msra.mxu0 %v763
    %1112 = vmatpush.bf16.msra.mxu0 %v759
    %1113 = vmatpush.bf16.msra.mxu0 %v755
    %1114 = vmatpush.bf16.msra.mxu0 %v751
    %1115 = vmatpush.bf16.msra.mxu0 %v747
    %1116 = vmatpush.bf16.msra.mxu0 %v743
    %1117 = vmatpush.bf16.msra.mxu0 %v739
    %1118 = vmatmul.bf16.gmra.mxu0 %v148
    %v1119 = vpop.f32.mrf.mxu0
    %v1120 = vadd.f32 %v1107, %v1119
    %v1121 = vpop.f32.mrf.mxu0
    %1122 = vdwg.mxu0
    %1123 = vmatpush.bf16.msra.mxu0 %v799
    %1124 = vmatpush.bf16.msra.mxu0 %v795
    %1125 = vmatpush.bf16.msra.mxu0 %v791
    %1126 = vmatpush.bf16.msra.mxu0 %v787
    %1127 = vmatpush.bf16.msra.mxu0 %v783
    %1128 = vmatpush.bf16.msra.mxu0 %v779
    %1129 = vmatpush.bf16.msra.mxu0 %v775
    %1130 = vmatpush.bf16.msra.mxu0 %v771
    %1131 = vmatmul.bf16.gmra.mxu0 %v149
    %v1132 = vpop.f32.mrf.mxu0
    %v1133 = vadd.f32 %v1120, %v1132
    %v1134 = vpop.f32.mrf.mxu0
    %1135 = vdwg.mxu0
    %v1136 = vmax.f32 %v977, 0.0
    %v1137 = vmax.f32 %v1029, 0.0
    %v1138 = vmax.f32 %v1081, 0.0
    %v1139 = vmax.f32 %v1133, 0.0
    %v1140 = vpack.c.bf16 %v1136, %v1136
    %v1141 = vpack.c.bf16 %v1137, %v1137
    %v1142 = vpack.c.bf16 %v1138, %v1138
    %v1143 = vpack.c.bf16 %v1139, %v1139
    %v1144 = vld [vmem:[#allocation4] sm:$0xf]
    %v1145 = vld [vmem:[#allocation4 + $0x4] sm:$0xf]
    %v1146 = vld [vmem:[#allocation4 + $0x8] sm:$0xf]
    %v1147 = vld [vmem:[#allocation4 + $0xc] sm:$0xf]
    %v1148 = vld [vmem:[#allocation4 + $0x10] sm:$0xf]
    %v1149 = vld [vmem:[#allocation4 + $0x14] sm:$0xf]
    %v1150 = vld [vmem:[#allocation4 + $0x18] sm:$0xf]
    %v1151 = vld [vmem:[#allocation4 + $0x1c] sm:$0xf]
    %v1152 = vld [vmem:[#allocation4 + $0x20] sm:$0xf]
    %v1153 = vld [vmem:[#allocation4 + $0x24] sm:$0xf]
    %v1154 = vld [vmem:[#allocation4 + $0x28] sm:$0xf]
    %v1155 = vld [vmem:[#allocation4 + $0x2c] sm:$0xf]
    %v1156 = vld [vmem:[#allocation4 + $0x30] sm:$0xf]
    %v1157 = vld [vmem:[#allocation4 + $0x34] sm:$0xf]
    %v1158 = vld [vmem:[#allocation4 + $0x38] sm:$0xf]
    %v1159 = vld [vmem:[#allocation4 + $0x3c] sm:$0xf]
    %v1160 = vld [vmem:[#allocation4 + $0x40] sm:$0xf]
    %v1161 = vld [vmem:[#allocation4 + $0x44] sm:$0xf]
    %v1162 = vld [vmem:[#allocation4 + $0x48] sm:$0xf]
    %v1163 = vld [vmem:[#allocation4 + $0x4c] sm:$0xf]
    %v1164 = vld [vmem:[#allocation4 + $0x50] sm:$0xf]
    %v1165 = vld [vmem:[#allocation4 + $0x54] sm:$0xf]
    %v1166 = vld [vmem:[#allocation4 + $0x58] sm:$0xf]
    %v1167 = vld [vmem:[#allocation4 + $0x5c] sm:$0xf]
    %v1168 = vld [vmem:[#allocation4 + $0x60] sm:$0xf]
    %v1169 = vld [vmem:[#allocation4 + $0x64] sm:$0xf]
    %v1170 = vld [vmem:[#allocation4 + $0x68] sm:$0xf]
    %v1171 = vld [vmem:[#allocation4 + $0x6c] sm:$0xf]
    %v1172 = vld [vmem:[#allocation4 + $0x70] sm:$0xf]
    %v1173 = vld [vmem:[#allocation4 + $0x74] sm:$0xf]
    %v1174 = vld [vmem:[#allocation4 + $0x78] sm:$0xf]
    %v1175 = vld [vmem:[#allocation4 + $0x7c] sm:$0xf]
    %v1176 = vld [vmem:[#allocation4 + $0x80] sm:$0xf]
    %v1177 = vld [vmem:[#allocation4 + $0x84] sm:$0xf]
    %v1178 = vld [vmem:[#allocation4 + $0x88] sm:$0xf]
    %v1179 = vld [vmem:[#allocation4 + $0x8c] sm:$0xf]
    %v1180 = vld [vmem:[#allocation4 + $0x90] sm:$0xf]
    %v1181 = vld [vmem:[#allocation4 + $0x94] sm:$0xf]
    %v1182 = vld [vmem:[#allocation4 + $0x98] sm:$0xf]
    %v1183 = vld [vmem:[#allocation4 + $0x9c] sm:$0xf]
    %v1184 = vld [vmem:[#allocation4 + $0xa0] sm:$0xf]
    %v1185 = vld [vmem:[#allocation4 + $0xa4] sm:$0xf]
    %v1186 = vld [vmem:[#allocation4 + $0xa8] sm:$0xf]
    %v1187 = vld [vmem:[#allocation4 + $0xac] sm:$0xf]
    %v1188 = vld [vmem:[#allocation4 + $0xb0] sm:$0xf]
    %v1189 = vld [vmem:[#allocation4 + $0xb4] sm:$0xf]
    %v1190 = vld [vmem:[#allocation4 + $0xb8] sm:$0xf]
    %v1191 = vld [vmem:[#allocation4 + $0xbc] sm:$0xf]
    %v1192 = vld [vmem:[#allocation4 + $0xc0] sm:$0xf]
    %v1193 = vld [vmem:[#allocation4 + $0xc4] sm:$0xf]
    %v1194 = vld [vmem:[#allocation4 + $0xc8] sm:$0xf]
    %v1195 = vld [vmem:[#allocation4 + $0xcc] sm:$0xf]
    %v1196 = vld [vmem:[#allocation4 + $0xd0] sm:$0xf]
    %v1197 = vld [vmem:[#allocation4 + $0xd4] sm:$0xf]
    %v1198 = vld [vmem:[#allocation4 + $0xd8] sm:$0xf]
    %v1199 = vld [vmem:[#allocation4 + $0xdc] sm:$0xf]
    %v1200 = vld [vmem:[#allocation4 + $0xe0] sm:$0xf]
    %v1201 = vld [vmem:[#allocation4 + $0xe4] sm:$0xf]
    %v1202 = vld [vmem:[#allocation4 + $0xe8] sm:$0xf]
    %v1203 = vld [vmem:[#allocation4 + $0xec] sm:$0xf]
    %v1204 = vld [vmem:[#allocation4 + $0xf0] sm:$0xf]
    %v1205 = vld [vmem:[#allocation4 + $0xf4] sm:$0xf]
    %v1206 = vld [vmem:[#allocation4 + $0xf8] sm:$0xf]
    %v1207 = vld [vmem:[#allocation4 + $0xfc] sm:$0xf]
    %v1208 = vld [vmem:[%s6] sm:$0x1]
    %v1210 = vperm.slane %v1208, 0
    %v1276 = vunpack.c.l.b16 %v1144
    %v1277 = vunpack.c.l.b16 %v1145
    %v1278 = vunpack.c.l.b16 %v1146
    %v1279 = vunpack.c.l.b16 %v1147
    %v1280 = vunpack.c.l.b16 %v1148
    %v1281 = vunpack.c.l.b16 %v1149
    %v1282 = vunpack.c.l.b16 %v1150
    %v1283 = vunpack.c.l.b16 %v1151
    %v1284 = vunpack.c.l.b16 %v1152
    %v1285 = vunpack.c.l.b16 %v1153
    %v1286 = vunpack.c.l.b16 %v1154
    %v1287 = vunpack.c.l.b16 %v1155
    %v1288 = vunpack.c.l.b16 %v1156
    %v1289 = vunpack.c.l.b16 %v1157
    %v1290 = vunpack.c.l.b16 %v1158
    %v1291 = vunpack.c.l.b16 %v1159
    %v1292 = vunpack.c.l.b16 %v1160
    %v1293 = vunpack.c.l.b16 %v1161
    %v1294 = vunpack.c.l.b16 %v1162
    %v1295 = vunpack.c.l.b16 %v1163
    %v1296 = vunpack.c.l.b16 %v1164
    %v1297 = vunpack.c.l.b16 %v1165
    %v1298 = vunpack.c.l.b16 %v1166
    %v1299 = vunpack.c.l.b16 %v1167
    %v1300 = vunpack.c.l.b16 %v1168
    %v1301 = vunpack.c.l.b16 %v1169
    %v1302 = vunpack.c.l.b16 %v1170
    %v1303 = vunpack.c.l.b16 %v1171
    %v1304 = vunpack.c.l.b16 %v1172
    %v1305 = vunpack.c.l.b16 %v1173
    %v1306 = vunpack.c.l.b16 %v1174
    %v1307 = vunpack.c.l.b16 %v1175
    %v1308 = vunpack.c.l.b16 %v1176
    %v1309 = vunpack.c.l.b16 %v1177
    %v1310 = vunpack.c.l.b16 %v1178
    %v1311 = vunpack.c.l.b16 %v1179
    %v1312 = vunpack.c.l.b16 %v1180
    %v1313 = vunpack.c.l.b16 %v1181
    %v1314 = vunpack.c.l.b16 %v1182
    %v1315 = vunpack.c.l.b16 %v1183
    %v1316 = vunpack.c.l.b16 %v1184
    %v1317 = vunpack.c.l.b16 %v1185
    %v1318 = vunpack.c.l.b16 %v1186
    %v1319 = vunpack.c.l.b16 %v1187
    %v1320 = vunpack.c.l.b16 %v1188
    %v1321 = vunpack.c.l.b16 %v1189
    %v1322 = vunpack.c.l.b16 %v1190
    %v1323 = vunpack.c.l.b16 %v1191
    %v1324 = vunpack.c.l.b16 %v1192
    %v1325 = vunpack.c.l.b16 %v1193
    %v1326 = vunpack.c.l.b16 %v1194
    %v1327 = vunpack.c.l.b16 %v1195
    %v1328 = vunpack.c.l.b16 %v1196
    %v1329 = vunpack.c.l.b16 %v1197
    %v1330 = vunpack.c.l.b16 %v1198
    %v1331 = vunpack.c.l.b16 %v1199
    %v1332 = vunpack.c.l.b16 %v1200
    %v1333 = vunpack.c.l.b16 %v1201
    %v1334 = vunpack.c.l.b16 %v1202
    %v1335 = vunpack.c.l.b16 %v1203
    %v1336 = vunpack.c.l.b16 %v1204
    %v1337 = vunpack.c.l.b16 %v1205
    %v1338 = vunpack.c.l.b16 %v1206
    %v1339 = vunpack.c.l.b16 %v1207
    %v1340 = vpack.c.b16 %v1277, %v1276
    %v1341 = vpack.c.b16 %v1279, %v1278
    %v1342 = vpack.c.b16 %v1281, %v1280
    %v1343 = vpack.c.b16 %v1283, %v1282
    %v1344 = vpack.c.b16 %v1285, %v1284
    %v1345 = vpack.c.b16 %v1287, %v1286
    %v1346 = vpack.c.b16 %v1289, %v1288
    %v1347 = vpack.c.b16 %v1291, %v1290
    %v1348 = vpack.c.b16 %v1293, %v1292
    %v1349 = vpack.c.b16 %v1295, %v1294
    %v1350 = vpack.c.b16 %v1297, %v1296
    %v1351 = vpack.c.b16 %v1299, %v1298
    %v1352 = vpack.c.b16 %v1301, %v1300
    %v1353 = vpack.c.b16 %v1303, %v1302
    %v1354 = vpack.c.b16 %v1305, %v1304
    %v1355 = vpack.c.b16 %v1307, %v1306
    %v1356 = vpack.c.b16 %v1309, %v1308
    %v1357 = vpack.c.b16 %v1311, %v1310
    %v1358 = vpack.c.b16 %v1313, %v1312
    %v1359 = vpack.c.b16 %v1315, %v1314
    %v1360 = vpack.c.b16 %v1317, %v1316
    %v1361 = vpack.c.b16 %v1319, %v1318
    %v1362 = vpack.c.b16 %v1321, %v1320
    %v1363 = vpack.c.b16 %v1323, %v1322
    %v1364 = vpack.c.b16 %v1325, %v1324
    %v1365 = vpack.c.b16 %v1327, %v1326
    %v1366 = vpack.c.b16 %v1329, %v1328
    %v1367 = vpack.c.b16 %v1331, %v1330
    %v1368 = vpack.c.b16 %v1333, %v1332
    %v1369 = vpack.c.b16 %v1335, %v1334
    %v1370 = vpack.c.b16 %v1337, %v1336
    %v1371 = vpack.c.b16 %v1339, %v1338
    %1404 = vmatpush.bf16.msra.mxu0 %v1347
    %1405 = vmatpush.bf16.msra.mxu0 %v1346
    %1406 = vmatpush.bf16.msra.mxu0 %v1345
    %1407 = vmatpush.bf16.msra.mxu0 %v1344
    %1408 = vmatpush.bf16.msra.mxu0 %v1343
    %1409 = vmatpush.bf16.msra.mxu0 %v1342
    %1410 = vmatpush.bf16.msra.mxu0 %v1341
    %1411 = vmatpush.bf16.msra.mxu0 %v1340
    %1412 = vmatmul.bf16.gmra.mxu0 %v1140
    %v1413 = vpop.f32.mrf.mxu0
    %v1414 = vadd.f32 %v1210, %v1413
    %v1415 = vpop.f32.mrf.mxu0
    %1416 = vdwg.mxu0
    %1417 = vmatpush.bf16.msra.mxu0 %v1355
    %1418 = vmatpush.bf16.msra.mxu0 %v1354
    %1419 = vmatpush.bf16.msra.mxu0 %v1353
    %1420 = vmatpush.bf16.msra.mxu0 %v1352
    %1421 = vmatpush.bf16.msra.mxu0 %v1351
    %1422 = vmatpush.bf16.msra.mxu0 %v1350
    %1423 = vmatpush.bf16.msra.mxu0 %v1349
    %1424 = vmatpush.bf16.msra.mxu0 %v1348
    %1425 = vmatmul.bf16.gmra.mxu0 %v1141
    %v1426 = vpop.f32.mrf.mxu0
    %v1427 = vadd.f32 %v1414, %v1426
    %v1428 = vpop.f32.mrf.mxu0
    %1429 = vdwg.mxu0
    %1430 = vmatpush.bf16.msra.mxu0 %v1363
    %1431 = vmatpush.bf16.msra.mxu0 %v1362
    %1432 = vmatpush.bf16.msra.mxu0 %v1361
    %1433 = vmatpush.bf16.msra.mxu0 %v1360
    %1434 = vmatpush.bf16.msra.mxu0 %v1359
    %1435 = vmatpush.bf16.msra.mxu0 %v1358
    %1436 = vmatpush.bf16.msra.mxu0 %v1357
    %1437 = vmatpush.bf16.msra.mxu0 %v1356
    %1438 = vmatmul.bf16.gmra.mxu0 %v1142
    %v1439 = vpop.f32.mrf.mxu0
    %v1440 = vadd.f32 %v1427, %v1439
    %v1441 = vpop.f32.mrf.mxu0
    %1442 = vdwg.mxu0
    %1443 = vmatpush.bf16.msra.mxu0 %v1371
    %1444 = vmatpush.bf16.msra.mxu0 %v1370
    %1445 = vmatpush.bf16.msra.mxu0 %v1369
    %1446 = vmatpush.bf16.msra.mxu0 %v1368
    %1447 = vmatpush.bf16.msra.mxu0 %v1367
    %1448 = vmatpush.bf16.msra.mxu0 %v1366
    %1449 = vmatpush.bf16.msra.mxu0 %v1365
    %1450 = vmatpush.bf16.msra.mxu0 %v1364
    %1451 = vmatmul.bf16.gmra.mxu0 %v1143
    %v1452 = vpop.f32.mrf.mxu0
    %v1453 = vadd.f32 %v1440, %v1452
    %v1454 = vpop.f32.mrf.mxu0
    %1455 = vdwg.mxu0
    %1456 = vst [vmem:[%s7] sm:$0xff] %v1453
    // Predicated region
    $region38: #{cnnnet_forward.1} parent=1 // pred_check
      _
    $region39: #{cnnnet_forward.1} parent=1 // pred_check_branch
      %1458 = sbr.rel (0) target = $region41
    $region40: #{cnnnet_forward.1} parent=1 // pred_region
      _
    $region41: #{cnnnet_forward.1} parent=1 // pred_fallthru
      _
    // Predicated region
    $region42: #{cnnnet_forward.1} parent=1 // pred_check
      _
    $region43: #{cnnnet_forward.1} parent=1 // pred_check_branch
      %1460 = sbr.rel (0) target = $region45
    $region44: #{cnnnet_forward.1} parent=1 // pred_region
      _
    $region45: #{cnnnet_forward.1} parent=1 // pred_fallthru
      _
    %1461 = vsyncpa [#allocation3], 1
    %1462 = vsyncpa [#allocation5], 1

</llo_original>
